<compile_context>
chip_gen: v6e
topology: v6e:2x2x1
jax: 0.10.0
libtpu: 0.0.40
codegen_flags: <defaults>
</compile_context>

<pallas_src>
import functools

import jax
import jax.numpy as jnp
from jax.experimental import pallas as pl
from jax.experimental.pallas import tpu as pltpu

_LANES = 128
_TILE_M = 1024  # rows per block; 1024x128 f32 = 512 KiB per buffer


# ---------------------------------------------------------------------------
# Kernels
# ---------------------------------------------------------------------------
def _threshold_kernel(x_ref, o_ref, *, threshold):
    # Elementwise compare on the VPU; emit the final bool directly.
    o_ref[...] = x_ref[...] > threshold


def _bernoulli_kernel(x_ref, bits_ref, o_ref):
    # Per-element Bernoulli: u ~ U[0,1) from 24 high-entropy bits, out = u < p.
    # (p = 0 -> always 0, p = 1 -> always 1.)
    u = (bits_ref[...] >> 8).astype(jnp.float32) * (1.0 / (1 << 24))
    p = x_ref[...].astype(jnp.float32)
    o_ref[...] = (u < p).astype(o_ref.dtype)


# ---------------------------------------------------------------------------
# Glue: lane-dense (M, 128) slab + tiled 1-D grid.
# ---------------------------------------------------------------------------
def _to_slab(x):
    flat = x.reshape(-1)
    n = flat.shape[0]
    pad = (-n) % _LANES
    if pad:
        # TODO(synk): ragged tail -> padded copy costs one extra HBM pass;
        # rarely triggers since image tensors usually have numel % 128 == 0.
        flat = jnp.pad(flat, (0, pad))
    return flat.reshape(-1, _LANES), n, pad


def _from_slab(slab, n, pad, shape):
    if pad:
        return slab.reshape(-1)[:n].reshape(shape)
    return slab.reshape(shape)


def _row_spec(tile_m):
    return pl.BlockSpec((tile_m, _LANES), lambda i: (i, 0))


def binarize_threshold(x, threshold):
    slab, n, pad = _to_slab(x)
    m = slab.shape[0]
    tile_m = min(_TILE_M, m)  # full-dim block when small; 8-divisible otherwise
    out = pl.pallas_call(
        functools.partial(_threshold_kernel, threshold=float(threshold)),
        out_shape=jax.ShapeDtypeStruct(slab.shape, jnp.bool_),
        grid=(pl.cdiv(m, tile_m),),
        in_specs=[_row_spec(tile_m)],
        out_specs=_row_spec(tile_m),
        compiler_params=pltpu.CompilerParams(
            dimension_semantics=("parallel",)),
    )(slab)
    return _from_slab(out, n, pad, x.shape)


def binarize_resample(x, seed=0):
    slab, n, pad = _to_slab(x)
    m = slab.shape[0]
    tile_m = min(_TILE_M, m)
    key = seed if hasattr(seed, "dtype") else jax.random.PRNGKey(seed)
    bits = jax.random.bits(key, shape=slab.shape, dtype=jnp.uint32)
    out = pl.pallas_call(
        _bernoulli_kernel,
        out_shape=jax.ShapeDtypeStruct(slab.shape, x.dtype),
        grid=(pl.cdiv(m, tile_m),),
        in_specs=[_row_spec(tile_m), _row_spec(tile_m)],
        out_specs=_row_spec(tile_m),
        compiler_params=pltpu.CompilerParams(
            dimension_semantics=("parallel",)),
    )(slab, bits)
    return _from_slab(out, n, pad, x.shape)


class Binarize:
    """JAX/Pallas port of oodd.datasets.transforms.Binarize."""

    def __init__(self, resample: bool = False, threshold: float = None):
        assert bool(threshold) != bool(resample), (
            "Must set exactly one of threshold and resample")
        self.resample = resample
        self.threshold = threshold

    def __call__(self, x, seed: int = 0):
        if self.resample:
            return binarize_resample(x, seed=seed)
        return binarize_threshold(x, self.threshold)


# ---------------------------------------------------------------------------
if __name__ == "__main__":
    key = jax.random.PRNGKey(0)
    # layout: NCHW, as in the PyTorch module (probabilities / image in [0, 1]).
    x = jax.random.uniform(key, (2, 4, 16, 16), dtype=jnp.float32)

    # Threshold path: x > 0.5  -> bool
    bin_thr = Binarize(threshold=0.5)
    y_thr = jax.block_until_ready(bin_thr(x))
    ref_thr = x > 0.5
    assert y_thr.dtype == jnp.bool_ and y_thr.shape == x.shape
    assert bool(jnp.all(y_thr == ref_thr))

    # Resample path: bernoulli(x) -> same dtype as x, values in {0, 1}
    bin_rs = Binarize(resample=True)
    y_rs = jax.block_until_ready(bin_rs(x, seed=42))
    assert y_rs.dtype == x.dtype and y_rs.shape == x.shape
    assert bool(jnp.all((y_rs == 0.0) | (y_rs == 1.0)))
    # Sanity: sample mean should roughly track mean probability.
    assert abs(float(y_rs.mean()) - float(x.mean())) < 0.2

    print("KERNEL_OK")
</pallas_src>

<mosaic_0001>
module attributes {stable_mosaic.version = 11 : i64} {
  func.func @_threshold_kernel(%arg0: i32, %arg1: memref<16x128xf32, #tpu.memory_space<vmem>>, %arg2: memref<16x128xi32, #tpu.memory_space<vmem>>) attributes {dimension_semantics = [#tpu.dimension_semantics<parallel>], iteration_bounds = array<i64: 1>, scalar_prefetch = 0 : i64, scratch_operands = 0 : i64, tpu.core_type = #tpu.core_type<tc>, window_params = [{transform_indices = @transform_0, window_bounds = array<i64: 16, 128>}, {transform_indices = @transform_1, window_bounds = array<i64: 16, 128>}]} {
    %c0 = arith.constant 0 : index
    %c0_0 = arith.constant 0 : index
    %0 = vector.load %arg1[%c0, %c0_0] : memref<16x128xf32, #tpu.memory_space<vmem>>, vector<16x128xf32>
    %cst = arith.constant 5.000000e-01 : f32
    %1 = vector.broadcast %cst : f32 to vector<16x128xf32>
    %2 = arith.cmpf ogt, %0, %1 : vector<16x128xf32>
    %c0_1 = arith.constant 0 : index
    %c0_2 = arith.constant 0 : index
    %3 = vector.load %arg2[%c0_1, %c0_2] : memref<16x128xi32, #tpu.memory_space<vmem>>, vector<16x128xi32>
    %4 = arith.extui %2 : vector<16x128xi1> to vector<16x128xi32>
    %cst_3 = arith.constant dense<0> : vector<16x128xi32>
    %5 = arith.cmpi ne, %3, %cst_3 : vector<16x128xi32>
    tpu.vector_store %arg2[%c0_1, %c0_2], %4 {strides = array<i32>} : memref<16x128xi32, #tpu.memory_space<vmem>>, vector<16x128xi32>,
    return
  }
  func.func @transform_0(%arg0: i32) -> (i32, i32) {
    %c0_i32 = arith.constant 0 : i32
    %c0_i32_0 = arith.constant 0 : i32
    return %arg0, %c0_i32 : i32, i32
  }
  func.func @transform_1(%arg0: i32) -> (i32, i32) {
    %c0_i32 = arith.constant 0 : i32
    %c0_i32_0 = arith.constant 0 : i32
    return %arg0, %c0_i32 : i32, i32
  }
}

</mosaic_0001>

<llo_original>
// kernel: tpu_custom_call.1
$region0: #{tpu_custom_call.1}
  #allocation0 [shape = 'u32[]', space=smem, size = 0x4, offset = 0x4, fixed_abs, tag = 'smem constant byte address 0x4 - core index']
  #allocation1 [shape = 'u32[144,128]{1,0:T(1,128)}', space=vmem, size = 0x12000, scoped, tag = 'internal scratch']
  %s0 = inlined_call_operand.hbm [shape: f32[16,128], index: 0, kind: input, shape index: {}]
  %s1 = inlined_call_operand.vmem [shape: s32[16,128], index: 1, kind: output, shape index: {}]
  %s2 = sld [smem:[#allocation0]]
  $region18: #{tpu_custom_call.1} parent=0
    _
  %s4 = ssub.s32 1, %s2
  %s5 = scalar_select 0, %s4, %s2
  $region1: #{tpu_custom_call.1} parent=0
    #allocation2 [shape = 'u8[8192]{0}', space=vmem, size = 0x2000, scoped, tag = 'input window, operand 0, single buffered']
    #allocation3 [shape = 's32[1]{0}', space=sflag, size = 0x4, scoped, tag = 'scoped memory for tpu_custom_call.1']
    %6 = vsyncpa [#allocation3], 0
    // Predicated region
    $region2: #{tpu_custom_call.1} parent=1 // pred_check
      _
    $region3: #{tpu_custom_call.1} parent=1 // pred_check_branch
      %8 = sbr.rel (0) target = $region5
    $region4: #{tpu_custom_call.1} parent=1 // pred_region
      %s10 = ssub.s32 256, 256
      %11 = vsyncadd [#allocation3], %s10
      %s12 = sshll.u32 [#allocation2], 4
      %s13 = int_to_ptr.vmem [resolvable:$true] %s12
      %18 = dma.hbm_to_vmem [thread:$0]  %s0, 256, %s13, [#allocation3], 128, 128, 8
    $region5: #{tpu_custom_call.1} parent=1 // pred_fallthru
      _
    // Predicated region
    $region6: #{tpu_custom_call.1} parent=1 // pred_check
      _
    $region7: #{tpu_custom_call.1} parent=1 // pred_check_branch
      %20 = sbr.rel (0) target = $region9
    $region8: #{tpu_custom_call.1} parent=1 // pred_region
      %21 = dma.done [#allocation3], 256
    $region9: #{tpu_custom_call.1} parent=1 // pred_fallthru
      _
    %v22 = vld [vmem:[#allocation2] sm:$0xff]
    %v23 = vld [vmem:[#allocation2 + $0x8] sm:$0xff]
    %vm24 = vcmp.gt.f32.partialorder %v22, 0.5
    %vm25 = vcmp.gt.f32.partialorder %v23, 0.5
    %v26 = vsel %vm24, 1, 0
    %v27 = vsel %vm25, 1, 0
    %28 = vst [vmem:[%s1] sm:$0xff] %v26
    %29 = vst [vmem:[%s1 + $0x8] sm:$0xff] %v27
    // Predicated region
    $region10: #{tpu_custom_call.1} parent=1 // pred_check
      _
    $region11: #{tpu_custom_call.1} parent=1 // pred_check_branch
      %31 = sbr.rel (0) target = $region13
    $region12: #{tpu_custom_call.1} parent=1 // pred_region
      _
    $region13: #{tpu_custom_call.1} parent=1 // pred_fallthru
      _
    // Predicated region
    $region14: #{tpu_custom_call.1} parent=1 // pred_check
      _
    $region15: #{tpu_custom_call.1} parent=1 // pred_check_branch
      %33 = sbr.rel (0) target = $region17
    $region16: #{tpu_custom_call.1} parent=1 // pred_region
      _
    $region17: #{tpu_custom_call.1} parent=1 // pred_fallthru
      _
    %34 = vsyncpa [#allocation3], 1

</llo_original>
